<compile_context>
chip_gen: v7x
topology: tpu7x:2x2x1
jax: 0.10.0
libtpu: 0.0.40
codegen_flags: <defaults>
</compile_context>

<pallas_src>
from functools import partial

import jax
import jax.numpy as jnp
from jax.experimental import pallas as pl
from jax.experimental.pallas import tpu as pltpu


def _tree_reduce(op, xs):
    """Balanced reduction tree (shorter dependency chain than a serial fold)."""
    while len(xs) > 1:
        nxt = [op(xs[i], xs[i + 1]) for i in range(0, len(xs) - 1, 2)]
        if len(xs) % 2:
            nxt.append(xs[-1])
        xs = nxt
    return xs[0]


def _router_kernel(x_ref, w_ref, b_ref, addm_ref, mulm_ref, o_ref, *, num_experts):
    """One batch tile.

    x_ref:    (TILE_B, D)        input dtype
    w_ref:    (D, HE_pad)        matmul dtype (bf16 fast path)
    b_ref:    (1, HE_pad)        f32
    addm_ref: (n_shift, HE_pad)  f32, 0 / -1e30 additive masks (per-head max)
    mulm_ref: (n_shift, HE_pad)  f32, 1 / 0 multiplicative masks (per-head sum)
    o_ref:    (TILE_B, HE_pad)   output dtype
    """
    x = x_ref[...].astype(jnp.float32)
    h = x * jax.nn.sigmoid(x)                         # SiLU in f32 (VPU + EUP)
    logits = jnp.dot(h.astype(w_ref.dtype), w_ref[...],
                     preferred_element_type=jnp.float32) + b_ref[...]

    he_pad = logits.shape[-1]
    # Roll shifts: +k pulls lane j-k, (he_pad - k) == -k pulls lane j+k.
    shifts = []
    for k in range(1, num_experts):
        shifts.append(k)
        shifts.append(he_pad - k)

    addm = addm_ref[...]
    mulm = mulm_ref[...]

    # Per-head max: XLU lane rolls + additive -inf masks, balanced max tree.
    cands = [logits]
    for i, s in enumerate(shifts):
        rolled = pltpu.roll(logits, shift=s, axis=1)
        cands.append(rolled + addm[i:i + 1, :])
    gmax = _tree_reduce(jnp.maximum, cands)

    ex = jnp.exp(logits - gmax)

    # Per-head denominator: same rolls on ex + multiplicative masks.
    terms = [ex]
    for i, s in enumerate(shifts):
        terms.append(pltpu.roll(ex, shift=s, axis=1) * mulm[i:i + 1, :])
    denom = _tree_reduce(lambda a, b: a + b, terms)

    o_ref[...] = (ex * pl.reciprocal(denom, approx=False)).astype(o_ref.dtype)


def prepare_router(weight, bias, heads, num_experts, matmul_dtype=jnp.bfloat16):
    """Once-per-model parameter prep: transpose / pad / roll masks / cast."""
    HE, D = weight.shape
    assert HE == heads * num_experts and bias.shape == (HE,)
    HE_pad = pl.cdiv(HE, 128) * 128                   # lane-dense padded width

    w_t = jnp.zeros((D, HE_pad), matmul_dtype).at[:, :HE].set(
        weight.T.astype(matmul_dtype))
    b2 = jnp.zeros((1, HE_pad), jnp.float32).at[:, :HE].set(
        bias.astype(jnp.float32))

    lane = jnp.arange(HE_pad)
    e_id = lane % num_experts                         # expert index within head
    real = lane < HE                                  # pad lanes are isolated
    add_rows, mul_rows = [], []
    for k in range(1, num_experts):
        # roll shift +k        -> value comes from lane j-k : same head iff e >= k
        valid_fwd = real & (e_id >= k)
        # roll shift he_pad-k  -> value comes from lane j+k : same head iff e+k < E
        valid_bwd = real & (e_id <= num_experts - 1 - k)
        for valid in (valid_fwd, valid_bwd):
            add_rows.append(jnp.where(valid, 0.0, -1e30).astype(jnp.float32))
            mul_rows.append(valid.astype(jnp.float32))
    if not add_rows:                                  # num_experts == 1 edge case
        add_rows = [jnp.full((HE_pad,), -1e30, jnp.float32)]
        mul_rows = [jnp.zeros((HE_pad,), jnp.float32)]
    add_mask = jnp.stack(add_rows, axis=0)            # (n_shift, HE_pad)
    mul_mask = jnp.stack(mul_rows, axis=0)

    return dict(w_t=w_t, b2=b2, add_mask=add_mask, mul_mask=mul_mask,
                heads=heads, num_experts=num_experts, he=HE, he_pad=HE_pad)


def _round_up(x, m):
    return (x + m - 1) // m * m


def _pick_tile_and_vmem(batch, d, he_pad, n_mask, in_isize, out_isize, w_isize):
    """Budget the FULL double-buffered working set; return (tile_b, vmem_limit)."""
    # Resident (constant-index_map) params; x2 for potential double buffering.
    resident = 2 * (d * he_pad * w_isize + he_pad * 4 + 2 * n_mask * he_pad * 4)
    # Per-row: double-buffered in/out tiles + generous f32 temporaries
    # (logits / gmax / ex / denom / rolled scratch).
    per_row = 2 * d * in_isize + 2 * he_pad * out_isize + 8 * he_pad * 4 + d * 4

    if batch <= 8:
        tile = batch                                  # single partial block
    else:
        # ~24 MiB working-set target: fits v5e 16 MiB scoped (after we raise the
        # limit below), v6e 32 MiB scoped, and v7x 64 MiB physical with headroom.
        avail = max(1 << 20, (24 << 20) - resident)
        tile = max(8, min(4096, (avail // per_row) // 8 * 8))
        # v7x megacore / pipeline overlap: aim for >= 4 grid steps when possible.
        tile = min(tile, max(8, _round_up(-(-batch // 4), 8)))
        tile = min(tile, _round_up(batch, 8))

    working = resident + tile * per_row
    vmem_limit = int(min(max(2 * working, 32 << 20), 56 << 20))
    return tile, vmem_limit


def router_forward(temb, params, *, return_padded=False):
    """temb: (B, D) -> routing scores (B, H, E) (or padded flat (B, HE_pad))."""
    B, D = temb.shape
    HE, HE_pad = params["he"], params["he_pad"]
    E = params["num_experts"]
    n_mask = params["add_mask"].shape[0]

    tile_b, vmem_limit = _pick_tile_and_vmem(
        B, D, HE_pad, n_mask, temb.dtype.itemsize, temb.dtype.itemsize,
        params["w_t"].dtype.itemsize)

    out_flat = pl.pallas_call(
        partial(_router_kernel, num_experts=E),
        out_shape=jax.ShapeDtypeStruct((B, HE_pad), temb.dtype),
        grid_spec=pltpu.PrefetchScalarGridSpec(
            num_scalar_prefetch=0,
            grid=(pl.cdiv(B, tile_b),),
            in_specs=[
                pl.BlockSpec((tile_b, D), lambda i: (i, 0)),        # temb tiles
                pl.BlockSpec((D, HE_pad), lambda i: (0, 0)),        # resident W
                pl.BlockSpec((1, HE_pad), lambda i: (0, 0)),        # resident bias
                pl.BlockSpec((n_mask, HE_pad), lambda i: (0, 0)),   # add masks
                pl.BlockSpec((n_mask, HE_pad), lambda i: (0, 0)),   # mul masks
            ],
            out_specs=pl.BlockSpec((tile_b, HE_pad), lambda i: (i, 0)),
        ),
        compiler_params=pltpu.CompilerParams(
            dimension_semantics=("parallel",),        # megacore sharding on v7x
            vmem_limit_bytes=vmem_limit),
    )(temb, params["w_t"], params["b2"], params["add_mask"], params["mul_mask"])

    if return_padded:
        return out_flat                               # lane-dense, no extra HBM pass
    # TODO(synk): per review, downstream consumers should take the padded flat
    # layout (or fuse this slice) to save one full output HBM round-trip; kept
    # here for parity with the nn.Module (B, H, E) API.
    return out_flat[:, :HE].reshape(B, params["heads"], E)


def router_reference(temb, weight, bias, heads, num_experts):
    h = temb.astype(jnp.float32) * jax.nn.sigmoid(temb.astype(jnp.float32))
    logits = h @ weight.astype(jnp.float32).T + bias.astype(jnp.float32)
    logits = logits.reshape(temb.shape[0], heads, num_experts)
    return jax.nn.softmax(logits, axis=-1)


if __name__ == "__main__":
    B, D = 2, 32
    heads, num_experts = 4, 3
    HE = heads * num_experts

    key = jax.random.PRNGKey(0)
    k_x, k_w, k_b, k_x2 = jax.random.split(key, 4)

    temb = jax.random.normal(k_x, (B, D), dtype=jnp.float32)
    # Deterministic "nn.Linear" params (synthetic, PyTorch (out, in) layout).
    weight = jax.random.normal(k_w, (HE, D), dtype=jnp.float32) * (1.0 / D ** 0.5)
    bias = jax.random.normal(k_b, (HE,), dtype=jnp.float32) * 0.1

    ref = router_reference(temb, weight, bias, heads, num_experts)

    # Fast path: bf16 MXU operands, f32 accumulation (recommended config).
    params = prepare_router(weight, bias, heads, num_experts,
                            matmul_dtype=jnp.bfloat16)
    out = jax.block_until_ready(router_forward(temb, params))
    assert out.shape == (B, heads, num_experts)
    assert jnp.allclose(out, ref, atol=2.5e-2)
    assert jnp.allclose(out.sum(-1), jnp.ones((B, heads)), atol=2e-3)

    # Exact path: f32 operands, tighter tolerance (sanity-check kernel math).
    params_f32 = prepare_router(weight, bias, heads, num_experts,
                                matmul_dtype=jnp.float32)
    out32 = jax.block_until_ready(router_forward(temb, params_f32))
    assert jnp.allclose(out32, ref, atol=2e-3)
    assert jnp.allclose(out32.sum(-1), jnp.ones((B, heads)), atol=1e-3)

    # Larger batch: exercises the multi-step pipelined grid and a partial tile.
    temb2 = jax.random.normal(k_x2, (40, D), dtype=jnp.float32)
    ref2 = router_reference(temb2, weight, bias, heads, num_experts)
    out2 = jax.block_until_ready(router_forward(temb2, params))
    assert out2.shape == (40, heads, num_experts)
    assert jnp.allclose(out2, ref2, atol=2.5e-2)

    print("KERNEL_OK")
</pallas_src>

<mosaic_0001>
module attributes {stable_mosaic.version = 11 : i64} {
  func.func @_router_kernel(%arg0: i32, %arg1: memref<2x32xf32, #tpu.memory_space<vmem>>, %arg2: memref<32x128xbf16, #tpu.memory_space<vmem>>, %arg3: memref<1x128xf32, #tpu.memory_space<vmem>>, %arg4: memref<4x128xf32, #tpu.memory_space<vmem>>, %arg5: memref<4x128xf32, #tpu.memory_space<vmem>>, %arg6: memref<2x128xf32, #tpu.memory_space<vmem>>) attributes {dimension_semantics = [#tpu.dimension_semantics<parallel>], iteration_bounds = array<i64: 1>, scalar_prefetch = 0 : i64, scratch_operands = 0 : i64, tpu.core_type = #tpu.core_type<tc>, window_params = [{transform_indices = @transform_0, window_bounds = array<i64: 2, 32>}, {pipeline_mode = #tpu.pipeline_mode<synchronous>, transform_indices = @transform_1, window_bounds = array<i64: 32, 128>}, {pipeline_mode = #tpu.pipeline_mode<synchronous>, transform_indices = @transform_2, window_bounds = array<i64: 1, 128>}, {pipeline_mode = #tpu.pipeline_mode<synchronous>, transform_indices = @transform_3, window_bounds = array<i64: 4, 128>}, {pipeline_mode = #tpu.pipeline_mode<synchronous>, transform_indices = @transform_4, window_bounds = array<i64: 4, 128>}, {transform_indices = @transform_5, window_bounds = array<i64: 2, 128>}]} {
    %c0 = arith.constant 0 : index
    %c0_0 = arith.constant 0 : index
    %0 = vector.load %arg1[%c0, %c0_0] : memref<2x32xf32, #tpu.memory_space<vmem>>, vector<2x32xf32>
    %1 = arith.negf %0 : vector<2x32xf32>
    %2 = math.exp %1 : vector<2x32xf32>
    %cst = arith.constant 1.000000e+00 : f32
    %3 = vector.broadcast %cst : f32 to vector<2x32xf32>
    %4 = arith.addf %3, %2 : vector<2x32xf32>
    %5 = arith.divf %3, %4 : vector<2x32xf32>
    %6 = arith.mulf %0, %5 : vector<2x32xf32>
    %7 = arith.truncf %6 : vector<2x32xf32> to vector<2x32xbf16>
    %c0_1 = arith.constant 0 : index
    %c0_2 = arith.constant 0 : index
    %8 = vector.load %arg2[%c0_1, %c0_2] : memref<32x128xbf16, #tpu.memory_space<vmem>>, vector<32x128xbf16>
    %cst_3 = arith.constant dense<0.000000e+00> : vector<2x128xf32>
    %9 = tpu.matmul %7, %8, %cst_3 {dimension_numbers = #tpu.dot_dimension_numbers<[1], [0], [0], [1], [0, 0, 1, 1], [], []>} : vector<2x32xbf16>, vector<32x128xbf16>, vector<2x128xf32> -> vector<2x128xf32>
    %c0_4 = arith.constant 0 : index
    %c0_5 = arith.constant 0 : index
    %10 = vector.load %arg3[%c0_4, %c0_5] : memref<1x128xf32, #tpu.memory_space<vmem>>, vector<1x128xf32>
    %11 = vector.broadcast %10 : vector<1x128xf32> to vector<2x128xf32>
    %12 = arith.addf %9, %11 : vector<2x128xf32>
    %c0_6 = arith.constant 0 : index
    %c0_7 = arith.constant 0 : index
    %13 = vector.load %arg4[%c0_6, %c0_7] : memref<4x128xf32, #tpu.memory_space<vmem>>, vector<4x128xf32>
    %c0_8 = arith.constant 0 : index
    %c0_9 = arith.constant 0 : index
    %14 = vector.load %arg5[%c0_8, %c0_9] : memref<4x128xf32, #tpu.memory_space<vmem>>, vector<4x128xf32>
    %c1_i32 = arith.constant 1 : i32
    %15 = tpu.dynamic_rotate %12 by %c1_i32 dim 1 : vector<2x128xf32>, i32 -> vector<2x128xf32>
    %16 = vector.extract_strided_slice %13 {offsets = [0, 0], sizes = [1, 128], strides = [1, 1]} : vector<4x128xf32> to vector<1x128xf32>
    %17 = vector.broadcast %16 : vector<1x128xf32> to vector<2x128xf32>
    %18 = arith.addf %15, %17 : vector<2x128xf32>
    %c127_i32 = arith.constant 127 : i32
    %19 = tpu.dynamic_rotate %12 by %c127_i32 dim 1 : vector<2x128xf32>, i32 -> vector<2x128xf32>
    %20 = vector.extract_strided_slice %13 {offsets = [1, 0], sizes = [1, 128], strides = [1, 1]} : vector<4x128xf32> to vector<1x128xf32>
    %21 = vector.broadcast %20 : vector<1x128xf32> to vector<2x128xf32>
    %22 = arith.addf %19, %21 : vector<2x128xf32>
    %c2_i32 = arith.constant 2 : i32
    %23 = tpu.dynamic_rotate %12 by %c2_i32 dim 1 : vector<2x128xf32>, i32 -> vector<2x128xf32>
    %24 = vector.extract_strided_slice %13 {offsets = [2, 0], sizes = [1, 128], strides = [1, 1]} : vector<4x128xf32> to vector<1x128xf32>
    %25 = vector.broadcast %24 : vector<1x128xf32> to vector<2x128xf32>
    %26 = arith.addf %23, %25 : vector<2x128xf32>
    %c126_i32 = arith.constant 126 : i32
    %27 = tpu.dynamic_rotate %12 by %c126_i32 dim 1 : vector<2x128xf32>, i32 -> vector<2x128xf32>
    %28 = vector.extract_strided_slice %13 {offsets = [3, 0], sizes = [1, 128], strides = [1, 1]} : vector<4x128xf32> to vector<1x128xf32>
    %29 = vector.broadcast %28 : vector<1x128xf32> to vector<2x128xf32>
    %30 = arith.addf %27, %29 : vector<2x128xf32>
    %31 = arith.maximumf %12, %18 : vector<2x128xf32>
    %32 = arith.maximumf %22, %26 : vector<2x128xf32>
    %33 = arith.maximumf %31, %32 : vector<2x128xf32>
    %34 = arith.maximumf %33, %30 : vector<2x128xf32>
    %35 = arith.subf %12, %34 : vector<2x128xf32>
    %36 = math.exp %35 : vector<2x128xf32>
    %c1_i32_10 = arith.constant 1 : i32
    %37 = tpu.dynamic_rotate %36 by %c1_i32_10 dim 1 : vector<2x128xf32>, i32 -> vector<2x128xf32>
    %38 = vector.extract_strided_slice %14 {offsets = [0, 0], sizes = [1, 128], strides = [1, 1]} : vector<4x128xf32> to vector<1x128xf32>
    %39 = vector.broadcast %38 : vector<1x128xf32> to vector<2x128xf32>
    %40 = arith.mulf %37, %39 : vector<2x128xf32>
    %c127_i32_11 = arith.constant 127 : i32
    %41 = tpu.dynamic_rotate %36 by %c127_i32_11 dim 1 : vector<2x128xf32>, i32 -> vector<2x128xf32>
    %42 = vector.extract_strided_slice %14 {offsets = [1, 0], sizes = [1, 128], strides = [1, 1]} : vector<4x128xf32> to vector<1x128xf32>
    %43 = vector.broadcast %42 : vector<1x128xf32> to vector<2x128xf32>
    %44 = arith.mulf %41, %43 : vector<2x128xf32>
    %c2_i32_12 = arith.constant 2 : i32
    %45 = tpu.dynamic_rotate %36 by %c2_i32_12 dim 1 : vector<2x128xf32>, i32 -> vector<2x128xf32>
    %46 = vector.extract_strided_slice %14 {offsets = [2, 0], sizes = [1, 128], strides = [1, 1]} : vector<4x128xf32> to vector<1x128xf32>
    %47 = vector.broadcast %46 : vector<1x128xf32> to vector<2x128xf32>
    %48 = arith.mulf %45, %47 : vector<2x128xf32>
    %c126_i32_13 = arith.constant 126 : i32
    %49 = tpu.dynamic_rotate %36 by %c126_i32_13 dim 1 : vector<2x128xf32>, i32 -> vector<2x128xf32>
    %50 = vector.extract_strided_slice %14 {offsets = [3, 0], sizes = [1, 128], strides = [1, 1]} : vector<4x128xf32> to vector<1x128xf32>
    %51 = vector.broadcast %50 : vector<1x128xf32> to vector<2x128xf32>
    %52 = arith.mulf %49, %51 : vector<2x128xf32>
    %53 = arith.addf %36, %40 : vector<2x128xf32>
    %54 = arith.addf %44, %48 : vector<2x128xf32>
    %55 = arith.addf %53, %54 : vector<2x128xf32>
    %56 = arith.addf %55, %52 : vector<2x128xf32>
    %57 = tpu.reciprocal %56 : vector<2x128xf32> -> vector<2x128xf32>
    %58 = arith.mulf %36, %57 : vector<2x128xf32>
    %c0_14 = arith.constant 0 : index
    %c0_15 = arith.constant 0 : index
    %59 = vector.load %arg6[%c0_14, %c0_15] : memref<2x128xf32, #tpu.memory_space<vmem>>, vector<2x128xf32>
    tpu.vector_store %arg6[%c0_14, %c0_15], %58 {strides = array<i32>} : memref<2x128xf32, #tpu.memory_space<vmem>>, vector<2x128xf32>,
    return
  }
  func.func @transform_0(%arg0: i32) -> (i32, i32) {
    %c0_i32 = arith.constant 0 : i32
    %c0_i32_0 = arith.constant 0 : i32
    return %arg0, %c0_i32 : i32, i32
  }
  func.func @transform_1(%arg0: i32) -> (i32, i32) {
    %c0_i32 = arith.constant 0 : i32
    %c0_i32_0 = arith.constant 0 : i32
    %c0_i32_1 = arith.constant 0 : i32
    return %c0_i32, %c0_i32_0 : i32, i32
  }
  func.func @transform_2(%arg0: i32) -> (i32, i32) {
    %c0_i32 = arith.constant 0 : i32
    %c0_i32_0 = arith.constant 0 : i32
    %c0_i32_1 = arith.constant 0 : i32
    return %c0_i32, %c0_i32_0 : i32, i32
  }
  func.func @transform_3(%arg0: i32) -> (i32, i32) {
    %c0_i32 = arith.constant 0 : i32
    %c0_i32_0 = arith.constant 0 : i32
    %c0_i32_1 = arith.constant 0 : i32
    return %c0_i32, %c0_i32_0 : i32, i32
  }
  func.func @transform_4(%arg0: i32) -> (i32, i32) {
    %c0_i32 = arith.constant 0 : i32
    %c0_i32_0 = arith.constant 0 : i32
    %c0_i32_1 = arith.constant 0 : i32
    return %c0_i32, %c0_i32_0 : i32, i32
  }
  func.func @transform_5(%arg0: i32) -> (i32, i32) {
    %c0_i32 = arith.constant 0 : i32
    %c0_i32_0 = arith.constant 0 : i32
    return %arg0, %c0_i32 : i32, i32
  }
}

</mosaic_0001>

<llo_original>
// kernel: tpu_custom_call.1
$region0: #{tpu_custom_call.1}
  #allocation0 [shape = 'u32[]', space=smem, size = 0x4, offset = 0x4, fixed_abs, tag = 'smem constant byte address 0x4 - core index']
  #allocation1 [shape = 'u32[144,128]{1,0:T(1,128)}', space=vmem, size = 0x12000, scoped, tag = 'internal scratch']
  %s0 = inlined_call_operand.hbm [shape: f32[2,32], index: 0, kind: input, shape index: {}]
  %s1 = inlined_call_operand.hbm [shape: bf16[32,128], index: 1, kind: input, shape index: {}]
  %s2 = inlined_call_operand.vmem [shape: f32[1,128], index: 2, kind: input, shape index: {}]
  %s3 = inlined_call_operand.vmem [shape: f32[4,128], index: 3, kind: input, shape index: {}]
  %s4 = inlined_call_operand.vmem [shape: f32[4,128], index: 4, kind: input, shape index: {}]
  %s5 = inlined_call_operand.hbm [shape: f32[2,128], index: 5, kind: output, shape index: {}]
  %s6 = sld [smem:[#allocation0]]
  $region38: #{tpu_custom_call.1} parent=0
    _
  %s8 = ssub.s32 1, %s6
  %s9 = scalar_select 0, %s8, %s6
  $region1: #{tpu_custom_call.1} parent=0
    #allocation2 [shape = 'u8[1024]{0}', space=vmem, size = 0x400, scoped, tag = 'input window, operand 0, single buffered']
    #allocation3 [shape = 's32[1]{0}', space=sflag, size = 0x4, scoped, tag = 'scoped memory for tpu_custom_call.1']
    #allocation4 [shape = 's32[1]{0}', space=sflag, size = 0x4, scoped, tag = 'scoped memory for tpu_custom_call.1']
    #allocation5 [shape = 'u8[8192]{0}', space=vmem, size = 0x2000, scoped, tag = 'input window, operand 1, single buffered']
    #allocation6 [shape = 's32[1]{0}', space=sflag, size = 0x4, scoped, tag = 'scoped memory for tpu_custom_call.1']
    #allocation7 [shape = 'u8[1024]{0}', space=vmem, size = 0x400, scoped, tag = 'output window, operand 0, single buffered']
    %10 = vsyncpa [#allocation3], 0
    %11 = vsyncpa [#allocation6], 0
    %12 = vsyncpa [#allocation4], 0
    // Predicated region
    $region2: #{tpu_custom_call.1} parent=1 // pred_check
      _
    $region3: #{tpu_custom_call.1} parent=1 // pred_check_branch
      %14 = sbr.rel (0) target = $region5
    $region4: #{tpu_custom_call.1} parent=1 // pred_region
      %s16 = ssub.s32 32, 32
      %17 = vsyncadd [#allocation3], %s16
      %s19 = sshll.u32 [#allocation2], 4
      %s20 = int_to_ptr.vmem [resolvable:$true] %s19
      %22 = dma.hbm_to_vmem [thread:$0]  %s0, 32, %s20, [#allocation3]
    $region5: #{tpu_custom_call.1} parent=1 // pred_fallthru
      _
    // Predicated region
    $region6: #{tpu_custom_call.1} parent=1 // pred_check
      _
    $region7: #{tpu_custom_call.1} parent=1 // pred_check_branch
      %24 = sbr.rel (0) target = $region9
    $region8: #{tpu_custom_call.1} parent=1 // pred_region
      %s26 = ssub.s32 256, 256
      %27 = vsyncadd [#allocation6], %s26
      %s28 = sshll.u32 [#allocation5], 4
      %s29 = int_to_ptr.vmem [resolvable:$true] %s28
      %34 = dma.hbm_to_vmem [thread:$0]  %s1, 256, %s29, [#allocation6], 64, 64, 4
    $region9: #{tpu_custom_call.1} parent=1 // pred_fallthru
      _
    // Predicated region
    $region10: #{tpu_custom_call.1} parent=1 // pred_check
      _
    $region11: #{tpu_custom_call.1} parent=1 // pred_check_branch
      %36 = sbr.rel (0) target = $region13
    $region12: #{tpu_custom_call.1} parent=1 // pred_region
      _
    $region13: #{tpu_custom_call.1} parent=1 // pred_fallthru
      _
    // Predicated region
    $region14: #{tpu_custom_call.1} parent=1 // pred_check
      _
    $region15: #{tpu_custom_call.1} parent=1 // pred_check_branch
      %38 = sbr.rel (0) target = $region17
    $region16: #{tpu_custom_call.1} parent=1 // pred_region
      _
    $region17: #{tpu_custom_call.1} parent=1 // pred_fallthru
      _
    // Predicated region
    $region18: #{tpu_custom_call.1} parent=1 // pred_check
      _
    $region19: #{tpu_custom_call.1} parent=1 // pred_check_branch
      %40 = sbr.rel (0) target = $region21
    $region20: #{tpu_custom_call.1} parent=1 // pred_region
      _
    $region21: #{tpu_custom_call.1} parent=1 // pred_fallthru
      _
    // Predicated region
    $region22: #{tpu_custom_call.1} parent=1 // pred_check
      _
    $region23: #{tpu_custom_call.1} parent=1 // pred_check_branch
      %42 = sbr.rel (0) target = $region25
    $region24: #{tpu_custom_call.1} parent=1 // pred_region
      %43 = dma.done [#allocation3], 32
    $region25: #{tpu_custom_call.1} parent=1 // pred_fallthru
      _
    // Predicated region
    $region26: #{tpu_custom_call.1} parent=1 // pred_check
      _
    $region27: #{tpu_custom_call.1} parent=1 // pred_check_branch
      %45 = sbr.rel (0) target = $region29
    $region28: #{tpu_custom_call.1} parent=1 // pred_region
      %46 = dma.done [#allocation6], 256
    $region29: #{tpu_custom_call.1} parent=1 // pred_fallthru
      _
    %v48 = vld [vmem:[#allocation2] sm:$0x3]
    %v49 = vxor.u32 %v48, 2147483648
    %v50 = vmul.f32 %v49, 1.442695
    %v51 = vpow.pop %v50
    %v52 = vadd.f32 %v51, 1.0
    %v53 = vrcp.pop %v52
    %v54 = vmul.f32 1.0, %v53
    %v55 = vmul.f32 %v48, %v54
    %v56 = vpack.c.bf16 %v55, %v55
    %v57 = vld [vmem:[#allocation5] sm:$0xf]
    %v58 = vld [vmem:[#allocation5 + $0x4] sm:$0xf]
    %v59 = vld [vmem:[#allocation5 + $0x8] sm:$0xf]
    %v60 = vld [vmem:[#allocation5 + $0xc] sm:$0xf]
    %v61 = vld [vmem:[%s2] sm:$0x1]
    %v63 = vlaneseq
    %v64 = vshrl.u32 %v63, 7
    %v65 = vsub.s32 0, %v64
    %v66 = vrot.slane %v61, %v65
    %v72 = vunpack.c.l.b16 %v57
    %v73 = vunpack.c.l.b16 %v58
    %v74 = vunpack.c.l.b16 %v59
    %v75 = vunpack.c.l.b16 %v60
    %v76 = vpack.c.b16 %v73, %v72
    %v77 = vpack.c.b16 %v75, %v74
    %vm80 = vcmask 261120
    %v82 = vsel %vm80, %v56, 0
    %84 = vmatprep.subr.bf16.mxu0 0
    %85 = vmatpush1.bf16.msra.mxu0 %v76
    %86 = vmatprep.subr.bf16.mxu0 0
    %87 = vmatpush1.bf16.msra.mxu0 %v77
    %88 = vmatprep.subr.bf16.mxu0 0
    %89 = vmatpush1.bf16.msra.mxu0 0
    %90 = vmatprep.subr.bf16.mxu0 0
    %91 = vmatpush1.bf16.msra.mxu0 0
    %92 = vmatprep.subr.bf16.mxu0 0
    %93 = vmatpush1.bf16.msra.mxu0 0
    %94 = vmatprep.subr.bf16.mxu0 0
    %95 = vmatpush1.bf16.msra.mxu0 0
    %96 = vmatprep.subr.bf16.mxu0 0
    %97 = vmatpush1.bf16.msra.mxu0 0
    %98 = vmatprep.subr.bf16.mxu0 0
    %99 = vmatpush1.bf16.msra.mxu0 0
    %100 = vmatprep.subr.bf16.mxu0 0
    %101 = vmatpush1.bf16.msra.mxu0 0
    %102 = vmatprep.subr.bf16.mxu0 0
    %103 = vmatpush1.bf16.msra.mxu0 0
    %104 = vmatprep.subr.bf16.mxu0 0
    %105 = vmatpush1.bf16.msra.mxu0 0
    %106 = vmatprep.subr.bf16.mxu0 0
    %107 = vmatpush1.bf16.msra.mxu0 0
    %108 = vmatprep.subr.bf16.mxu0 0
    %109 = vmatpush1.bf16.msra.mxu0 0
    %110 = vmatprep.subr.bf16.mxu0 0
    %111 = vmatpush1.bf16.msra.mxu0 0
    %112 = vmatprep.subr.bf16.mxu0 0
    %113 = vmatpush1.bf16.msra.mxu0 0
    %114 = vmatprep.subr.bf16.mxu0 0
    %115 = vmatpush1.bf16.msra.mxu0 0
    %116 = vmatprep.mubr.bf16.mxu0 0
    %117 = vmatmul.mubr.bf16.gmra.mrb[0].mxu0 %v82
    %v118 = vpop.f32.mrb[0].mxu0
    %v119 = vadd.f32 %v66, %v118
    %v120 = vpop.f32.mrb[0].mxu0
    %v121 = vpop.f32.mrb[0].mxu0
    %v122 = vpop.f32.mrb[0].mxu0
    %123 = vdwg.mxu0
    %v124 = vld [vmem:[%s3] sm:$0xf]
    %v125 = vld [vmem:[%s4] sm:$0xf]
    %126 = vrot.lane.b32.xlu0 %v119, 1
    %v127 = vpop.permute.xlu0 %126
    %v128 = vlaneseq
    %v129 = vshrl.u32 %v128, 7
    %v130 = vsub.s32 0, %v129
    %v131 = vrot.slane %v124, %v130
    %v132 = vadd.f32 %v127, %v131
    %133 = vrot.lane.b32.xlu0 %v119, 127
    %v134 = vpop.permute.xlu0 %133
    %v135 = vlaneseq
    %v136 = vshrl.u32 %v135, 7
    %v137 = vsub.s32 1, %v136
    %v138 = vrot.slane %v124, %v137
    %v139 = vadd.f32 %v134, %v138
    %140 = vrot.lane.b32.xlu0 %v119, 2
    %v141 = vpop.permute.xlu0 %140
    %v142 = vlaneseq
    %v143 = vshrl.u32 %v142, 7
    %v144 = vsub.s32 2, %v143
    %v145 = vrot.slane %v124, %v144
    %v146 = vadd.f32 %v141, %v145
    %147 = vrot.lane.b32.xlu0 %v119, 126
    %v148 = vpop.permute.xlu0 %147
    %v149 = vlaneseq
    %v150 = vshrl.u32 %v149, 7
    %v151 = vsub.s32 3, %v150
    %v152 = vrot.slane %v124, %v151
    %v153 = vadd.f32 %v148, %v152
    %v154 = vmax.f32 %v119, %v132
    %v155 = vmax.f32 %v139, %v146
    %v156 = vmax.f32 %v154, %v155
    %v157 = vmax.f32 %v156, %v153
    %v158 = vsub.f32 %v119, %v157
    %v159 = vmul.f32 %v158, 1.442695
    %v160 = vpow.pop %v159
    %161 = vrot.lane.b32.xlu0 %v160, 1
    %v162 = vpop.permute.xlu0 %161
    %v163 = vlaneseq
    %v164 = vshrl.u32 %v163, 7
    %v165 = vsub.s32 0, %v164
    %v166 = vrot.slane %v125, %v165
    %v167 = vmul.f32 %v162, %v166
    %168 = vrot.lane.b32.xlu0 %v160, 127
    %v169 = vpop.permute.xlu0 %168
    %v170 = vlaneseq
    %v171 = vshrl.u32 %v170, 7
    %v172 = vsub.s32 1, %v171
    %v173 = vrot.slane %v125, %v172
    %v174 = vmul.f32 %v169, %v173
    %175 = vrot.lane.b32.xlu0 %v160, 2
    %v176 = vpop.permute.xlu0 %175
    %v177 = vlaneseq
    %v178 = vshrl.u32 %v177, 7
    %v179 = vsub.s32 2, %v178
    %v180 = vrot.slane %v125, %v179
    %v181 = vmul.f32 %v176, %v180
    %182 = vrot.lane.b32.xlu0 %v160, 126
    %v183 = vpop.permute.xlu0 %182
    %v184 = vlaneseq
    %v185 = vshrl.u32 %v184, 7
    %v186 = vsub.s32 3, %v185
    %v187 = vrot.slane %v125, %v186
    %v188 = vmul.f32 %v183, %v187
    %v189 = vadd.f32 %v160, %v167
    %v190 = vadd.f32 %v174, %v181
    %v191 = vadd.f32 %v189, %v190
    %v192 = vadd.f32 %v191, %v188
    %v193 = vrcp.pop %v192
    %v194 = vmul.f32 %v160, %v193
    %195 = vst [vmem:[#allocation7] sm:$0x3] %v194
    // Predicated region
    $region30: #{tpu_custom_call.1} parent=1 // pred_check
      _
    $region31: #{tpu_custom_call.1} parent=1 // pred_check_branch
      %197 = sbr.rel (0) target = $region33
    $region32: #{tpu_custom_call.1} parent=1 // pred_region
      %s199 = ssub.s32 32, 32
      %200 = vsyncadd [#allocation4], %s199
      %s202 = sshll.u32 [#allocation7], 4
      %s203 = int_to_ptr.vmem [resolvable:$true] %s202
      %205 = dma.vmem_to_hbm [thread:$0]  %s203, 32, %s5, [#allocation4]
    $region33: #{tpu_custom_call.1} parent=1 // pred_fallthru
      _
    // Predicated region
    $region34: #{tpu_custom_call.1} parent=1 // pred_check
      _
    $region35: #{tpu_custom_call.1} parent=1 // pred_check_branch
      %207 = sbr.rel (0) target = $region37
    $region36: #{tpu_custom_call.1} parent=1 // pred_region
      %208 = dma.done [#allocation4], 32
    $region37: #{tpu_custom_call.1} parent=1 // pred_fallthru
      _
    %209 = vsyncpa [#allocation3], 1
    %210 = vsyncpa [#allocation6], 1
    %211 = vsyncpa [#allocation4], 1

</llo_original>
